<compile_context>
chip_gen: v5e
topology: v5e:2x2
jax: 0.10.0
libtpu: 0.0.40
codegen_flags: <defaults>
</compile_context>

<pallas_src>
import functools
import math
import numpy as np
import jax
import jax.numpy as jnp
from jax import lax
from jax.experimental import pallas as pl
from jax.experimental.pallas import tpu as pltpu

SHIFTS = (1, 3)          # dilations used by LCA2
# Neighbor offsets (dy, dx) implied by the fixed depthwise kernels
# [w1_0..w1_3, w2_0..w2_3] (PyTorch conv == cross-correlation):
#   out_k = x[center] - x[center + (dy_k*d, dx_k*d)]   (zero padded)
OFFSETS = ((-1, -1), (-1, 0), (-1, 1), (0, -1),
           (1, 1), (1, 0), (1, -1), (0, 1))
N_DIR = 2 * len(OFFSETS)   # 16 (offset, dilation) pairs


def _shift_masks(H, W):
    """(16, H*W) f32 validity masks.  masks[2*k+di, h*W+w] == 1 iff the source
    pixel (h+dy_k*d, w+dx_k*d) lies inside the image, i.e. the rolled value is
    valid; 0 where zero padding applies (vertical OOB and the horizontal wrap
    across flattened row boundaries)."""
    hh, ww = np.meshgrid(np.arange(H), np.arange(W), indexing="ij")
    m = np.zeros((N_DIR, H * W), np.float32)
    for k, (dy, dx) in enumerate(OFFSETS):
        for di, d in enumerate(SHIFTS):
            ok = ((hh + dy * d >= 0) & (hh + dy * d < H) &
                  (ww + dx * d >= 0) & (ww + dx * d < W))
            m[2 * k + di] = ok.reshape(-1).astype(np.float32)
    return jnp.asarray(m)


def _pick_tile_rows(total_rows, C, cap=128):
    """Rows per grid step: equal to total_rows when small, otherwise the
    largest divisor of total_rows that is a multiple of lcm(8, C) (full
    sublanes, whole batch groups) and <= cap (keeps the folded tables tiny)."""
    if total_rows <= cap:
        return total_rows
    step = (8 * C) // math.gcd(8, C)
    best = 0
    r = step
    while r <= cap:
        if total_rows % r == 0:
            best = r
        r += step
    return best if best > 0 else total_rows


def _build_tables(C, H, W, TR, w8, bn_scale, bn_bias, w2):
    """Host-side constant folding (exact: the folded path is linear in the
    weights).  Returns a (18 + 2C, TR, H*W) f32 table of pre-broadcast planes:
      slabs [0..15]        : (w8 * bn_scale / 3)[row-channel, dir] * boundary mask
      slab  [16]           : center-pixel coefficient (2 * sum_k folded w8)
      slab  [17]           : BN bias (eval mode)
      slabs [18+2s, 19+2s] : channel-mix circulant coefficients (s = 0..C-1)
    """
    HW = H * W
    ch = np.arange(TR) % C                                     # channel of each row
    w8s = w8.astype(jnp.float32) * (bn_scale / 3.0)[:, None]   # fold BN scale & /3
    boundary = _shift_masks(H, W)                               # (16, HW)

    dir_w = jnp.repeat(w8s, 2, axis=1)[ch]                      # (TR, 16)
    wm = dir_w.T[:, :, None] * boundary[:, None, :]             # (16, TR, HW)

    cen_coef = (2.0 * jnp.sum(w8s, axis=1))[ch]                 # (TR,)
    bias = bn_bias.astype(jnp.float32)[ch]                      # (TR,)

    # Final 1x1 conv is block-diagonal over the merged rows (one w2 block per
    # batch element).  Express it as a within-group circulant:
    #   att[r] = sum_s coefA_s[r]*a[r+s] + coefB_s[r]*a[r+s-C]
    w2f = w2.astype(jnp.float32)
    mix = []
    for s in range(C):
        j = (ch + s) % C
        val = w2f[ch, j]                                        # (TR,)
        in_group = jnp.asarray((ch + s) < C)
        mix.append(jnp.where(in_group, val, 0.0))               # coefA_s
        mix.append(jnp.where(in_group, 0.0, val))               # coefB_s
    per_row = jnp.stack([cen_coef, bias] + mix, axis=0)         # (2 + 2C, TR)
    planes = jnp.broadcast_to(per_row[:, :, None], per_row.shape + (HW,))
    return jnp.concatenate([wm, planes], axis=0).astype(jnp.float32)


def _lca2_kernel(x_ref, tab_ref, out_ref, *, C, H, W, TR):
    HW = H * W
    x = x_ref[...]                                   # (TR, HW), rows = (batch, channel)

    # --- depthwise directional diffs (dil. 1 & 3) + grouped 1x1 conv + BN ------
    # Weights, /3, BN scale and zero-pad masks are all pre-folded into per-row
    # planes, so the hot loop is roll (XLU) -> mul -> sub (VPU), full occupancy.
    # (mask*rolled emulates zero padding exactly for finite inputs; use
    #  jnp.where if inf/NaN inputs must stay exactly zero-padded.)
    acc = tab_ref[N_DIR] * x                         # center-pixel coefficient plane
    for k, (dy, dx) in enumerate(OFFSETS):
        for di, d in enumerate(SHIFTS):
            delta = (dy * d) * W + (dx * d)          # flat source offset
            rolled = pltpu.roll(x, shift=(-delta) % HW, axis=1)
            acc = acc - tab_ref[2 * k + di] * rolled
    a = acc + tab_ref[N_DIR + 1]                     # BN bias (eval mode)
    a = a * jax.nn.sigmoid(a)                        # SiLU (EUP)

    # --- final 1x1 conv across channels + sigmoid ------------------------------
    # Block-diagonal (per batch group) channel mix as a within-group circulant:
    # 2*(C-1) sublane rolls on the otherwise-idle XLU + full-occupancy VPU FMAs.
    base = N_DIR + 2
    att = tab_ref[base] * a                          # s = 0 term (coefB_0 == 0)
    for s in range(1, C):
        up = pltpu.roll(a, shift=(-s) % TR, axis=0)        # a[(r+s) mod TR]
        dn = pltpu.roll(a, shift=(C - s) % TR, axis=0)     # a[(r+s-C) mod TR]
        att = att + tab_ref[base + 2 * s] * up + tab_ref[base + 2 * s + 1] * dn
    att = jax.nn.sigmoid(att)

    # forward: cen * spatial_attention(cen) + cen
    out_ref[...] = x * att + x


def lca2_forward(cen, mask, w8, bn_scale, bn_bias, w2):
    """cen: (N, C, H, W) f32.  `mask` is accepted for signature parity with the
    PyTorch module but (as in the reference) unused."""
    del mask
    N, C, H, W = cen.shape
    HW = H * W
    R = N * C
    x = cen.reshape(R, HW)                           # lane-dense spatial, merged rows

    TR = _pick_tile_rows(R, C)
    tab = _build_tables(C, H, W, TR, w8, bn_scale, bn_bias, w2)
    n_slabs = tab.shape[0]                           # 18 + 2C

    kernel = functools.partial(_lca2_kernel, C=C, H=H, W=W, TR=TR)
    out = pl.pallas_call(
        kernel,
        out_shape=jax.ShapeDtypeStruct((R, HW), cen.dtype),
        grid_spec=pltpu.PrefetchScalarGridSpec(
            num_scalar_prefetch=0,
            grid=(R // TR,),
            in_specs=[
                pl.BlockSpec((TR, HW), lambda i: (i, 0)),                # x rows
                pl.BlockSpec((n_slabs, TR, HW), lambda i: (0, 0, 0)),    # folded tables
            ],
            out_specs=pl.BlockSpec((TR, HW), lambda i: (i, 0)),
        ),
        compiler_params=pltpu.CompilerParams(dimension_semantics=("parallel",)),
    )(x, tab)
    return out.reshape(N, C, H, W)


def lca2_reference(cen, w8, bn_scale, bn_bias, w2):
    """Pure-JAX reference mirroring the PyTorch module (eval-mode BN)."""
    N, C, H, W = cen.shape
    w1 = np.array([[[-1, 0, 0], [0, 1, 0], [0, 0, 0]],
                   [[0, -1, 0], [0, 1, 0], [0, 0, 0]],
                   [[0, 0, -1], [0, 1, 0], [0, 0, 0]],
                   [[0, 0, 0], [-1, 1, 0], [0, 0, 0]]], dtype=np.float32)
    w1 = w1.reshape(4, 1, 3, 3)
    w2k = w1[:, :, ::-1, ::-1].copy()
    wk = np.concatenate([w1, w2k], axis=0)               # (8, 1, 3, 3)
    wk = jnp.asarray(np.tile(wk, (C, 1, 1, 1)))          # (8C, 1, 3, 3)
    out = 0.0
    for d in SHIFTS:
        out = out + lax.conv_general_dilated(
            cen, wk, window_strides=(1, 1), padding=[(d, d), (d, d)],
            rhs_dilation=(d, d), feature_group_count=C,
            dimension_numbers=('NCHW', 'OIHW', 'NCHW'),
            precision=lax.Precision.HIGHEST)
    outs = out / 3.0
    g = outs.reshape(N, C, 8, H, W)
    a = jnp.einsum('nckhw,ck->nchw', g, w8, precision=lax.Precision.HIGHEST)
    a = a * bn_scale[None, :, None, None] + bn_bias[None, :, None, None]
    a = a * jax.nn.sigmoid(a)                             # SiLU
    att = jnp.einsum('nchw,oc->nohw', a, w2, precision=lax.Precision.HIGHEST)
    att = jax.nn.sigmoid(att)
    return cen * att + cen


if __name__ == "__main__":
    N, C, H, W = 2, 4, 16, 16
    key = jax.random.PRNGKey(0)
    k1, k2, k3, k4, k5, k6 = jax.random.split(key, 6)

    cen = jax.random.normal(k1, (N, C, H, W), jnp.float32)
    mask = jax.random.normal(k2, (N, 1, H, W), jnp.float32)   # unused, parity only

    # Deterministic synthetic parameters (shapes from the module __init__):
    w8 = 0.25 * jax.random.normal(k3, (C, 8), jnp.float32)    # grouped conv (C,8,1,1)
    w2 = 0.25 * jax.random.normal(k4, (C, C), jnp.float32)    # final conv  (C,C,1,1)
    gamma = 1.0 + 0.1 * jax.random.normal(k5, (C,), jnp.float32)
    beta = 0.1 * jax.random.normal(k6, (C,), jnp.float32)
    running_mean = jnp.zeros((C,), jnp.float32)
    running_var = jnp.ones((C,), jnp.float32)
    eps = 1e-5
    bn_scale = gamma / jnp.sqrt(running_var + eps)
    bn_bias = beta - running_mean * bn_scale

    out = jax.block_until_ready(lca2_forward(cen, mask, w8, bn_scale, bn_bias, w2))
    ref = jax.block_until_ready(lca2_reference(cen, w8, bn_scale, bn_bias, w2))
    np.testing.assert_allclose(np.asarray(out), np.asarray(ref), rtol=2e-4, atol=2e-5)
    print("KERNEL_OK")
</pallas_src>

<mosaic_0001>
module attributes {stable_mosaic.version = 11 : i64} {
  func.func @_lca2_kernel(%arg0: i32, %arg1: memref<8x256xf32, #tpu.memory_space<vmem>>, %arg2: memref<26x8x256xf32, #tpu.memory_space<vmem>>, %arg3: memref<8x256xf32, #tpu.memory_space<vmem>>) attributes {dimension_semantics = [#tpu.dimension_semantics<parallel>], iteration_bounds = array<i64: 1>, scalar_prefetch = 0 : i64, scratch_operands = 0 : i64, tpu.core_type = #tpu.core_type<tc>, window_params = [{transform_indices = @transform_0, window_bounds = array<i64: 8, 256>}, {pipeline_mode = #tpu.pipeline_mode<synchronous>, transform_indices = @transform_1, window_bounds = array<i64: 26, 8, 256>}, {transform_indices = @transform_2, window_bounds = array<i64: 8, 256>}]} {
    %c0 = arith.constant 0 : index
    %c0_0 = arith.constant 0 : index
    %0 = vector.load %arg1[%c0, %c0_0] : memref<8x256xf32, #tpu.memory_space<vmem>>, vector<8x256xf32>
    %c16 = arith.constant 16 : index
    %c0_1 = arith.constant 0 : index
    %c0_2 = arith.constant 0 : index
    %1 = vector.load %arg2[%c16, %c0_1, %c0_2] : memref<26x8x256xf32, #tpu.memory_space<vmem>>, vector<1x8x256xf32>
    %2 = vector.shape_cast %1 : vector<1x8x256xf32> to vector<8x256xf32>
    %3 = arith.mulf %2, %0 : vector<8x256xf32>
    %c17_i32 = arith.constant 17 : i32
    %4 = tpu.dynamic_rotate %0 by %c17_i32 dim 1 : vector<8x256xf32>, i32 -> vector<8x256xf32>
    %c0_3 = arith.constant 0 : index
    %c0_4 = arith.constant 0 : index
    %c0_5 = arith.constant 0 : index
    %5 = vector.load %arg2[%c0_3, %c0_4, %c0_5] : memref<26x8x256xf32, #tpu.memory_space<vmem>>, vector<1x8x256xf32>
    %6 = vector.shape_cast %5 : vector<1x8x256xf32> to vector<8x256xf32>
    %7 = arith.mulf %6, %4 : vector<8x256xf32>
    %8 = arith.subf %3, %7 : vector<8x256xf32>
    %c51_i32 = arith.constant 51 : i32
    %9 = tpu.dynamic_rotate %0 by %c51_i32 dim 1 : vector<8x256xf32>, i32 -> vector<8x256xf32>
    %c1 = arith.constant 1 : index
    %c0_6 = arith.constant 0 : index
    %c0_7 = arith.constant 0 : index
    %10 = vector.load %arg2[%c1, %c0_6, %c0_7] : memref<26x8x256xf32, #tpu.memory_space<vmem>>, vector<1x8x256xf32>
    %11 = vector.shape_cast %10 : vector<1x8x256xf32> to vector<8x256xf32>
    %12 = arith.mulf %11, %9 : vector<8x256xf32>
    %13 = arith.subf %8, %12 : vector<8x256xf32>
    %c16_i32 = arith.constant 16 : i32
    %14 = tpu.dynamic_rotate %0 by %c16_i32 dim 1 : vector<8x256xf32>, i32 -> vector<8x256xf32>
    %c2 = arith.constant 2 : index
    %c0_8 = arith.constant 0 : index
    %c0_9 = arith.constant 0 : index
    %15 = vector.load %arg2[%c2, %c0_8, %c0_9] : memref<26x8x256xf32, #tpu.memory_space<vmem>>, vector<1x8x256xf32>
    %16 = vector.shape_cast %15 : vector<1x8x256xf32> to vector<8x256xf32>
    %17 = arith.mulf %16, %14 : vector<8x256xf32>
    %18 = arith.subf %13, %17 : vector<8x256xf32>
    %c48_i32 = arith.constant 48 : i32
    %19 = tpu.dynamic_rotate %0 by %c48_i32 dim 1 : vector<8x256xf32>, i32 -> vector<8x256xf32>
    %c3 = arith.constant 3 : index
    %c0_10 = arith.constant 0 : index
    %c0_11 = arith.constant 0 : index
    %20 = vector.load %arg2[%c3, %c0_10, %c0_11] : memref<26x8x256xf32, #tpu.memory_space<vmem>>, vector<1x8x256xf32>
    %21 = vector.shape_cast %20 : vector<1x8x256xf32> to vector<8x256xf32>
    %22 = arith.mulf %21, %19 : vector<8x256xf32>
    %23 = arith.subf %18, %22 : vector<8x256xf32>
    %c15_i32 = arith.constant 15 : i32
    %24 = tpu.dynamic_rotate %0 by %c15_i32 dim 1 : vector<8x256xf32>, i32 -> vector<8x256xf32>
    %c4 = arith.constant 4 : index
    %c0_12 = arith.constant 0 : index
    %c0_13 = arith.constant 0 : index
    %25 = vector.load %arg2[%c4, %c0_12, %c0_13] : memref<26x8x256xf32, #tpu.memory_space<vmem>>, vector<1x8x256xf32>
    %26 = vector.shape_cast %25 : vector<1x8x256xf32> to vector<8x256xf32>
    %27 = arith.mulf %26, %24 : vector<8x256xf32>
    %28 = arith.subf %23, %27 : vector<8x256xf32>
    %c45_i32 = arith.constant 45 : i32
    %29 = tpu.dynamic_rotate %0 by %c45_i32 dim 1 : vector<8x256xf32>, i32 -> vector<8x256xf32>
    %c5 = arith.constant 5 : index
    %c0_14 = arith.constant 0 : index
    %c0_15 = arith.constant 0 : index
    %30 = vector.load %arg2[%c5, %c0_14, %c0_15] : memref<26x8x256xf32, #tpu.memory_space<vmem>>, vector<1x8x256xf32>
    %31 = vector.shape_cast %30 : vector<1x8x256xf32> to vector<8x256xf32>
    %32 = arith.mulf %31, %29 : vector<8x256xf32>
    %33 = arith.subf %28, %32 : vector<8x256xf32>
    %c1_i32 = arith.constant 1 : i32
    %34 = tpu.dynamic_rotate %0 by %c1_i32 dim 1 : vector<8x256xf32>, i32 -> vector<8x256xf32>
    %c6 = arith.constant 6 : index
    %c0_16 = arith.constant 0 : index
    %c0_17 = arith.constant 0 : index
    %35 = vector.load %arg2[%c6, %c0_16, %c0_17] : memref<26x8x256xf32, #tpu.memory_space<vmem>>, vector<1x8x256xf32>
    %36 = vector.shape_cast %35 : vector<1x8x256xf32> to vector<8x256xf32>
    %37 = arith.mulf %36, %34 : vector<8x256xf32>
    %38 = arith.subf %33, %37 : vector<8x256xf32>
    %c3_i32 = arith.constant 3 : i32
    %39 = tpu.dynamic_rotate %0 by %c3_i32 dim 1 : vector<8x256xf32>, i32 -> vector<8x256xf32>
    %c7 = arith.constant 7 : index
    %c0_18 = arith.constant 0 : index
    %c0_19 = arith.constant 0 : index
    %40 = vector.load %arg2[%c7, %c0_18, %c0_19] : memref<26x8x256xf32, #tpu.memory_space<vmem>>, vector<1x8x256xf32>
    %41 = vector.shape_cast %40 : vector<1x8x256xf32> to vector<8x256xf32>
    %42 = arith.mulf %41, %39 : vector<8x256xf32>
    %43 = arith.subf %38, %42 : vector<8x256xf32>
    %c239_i32 = arith.constant 239 : i32
    %44 = tpu.dynamic_rotate %0 by %c239_i32 dim 1 : vector<8x256xf32>, i32 -> vector<8x256xf32>
    %c8 = arith.constant 8 : index
    %c0_20 = arith.constant 0 : index
    %c0_21 = arith.constant 0 : index
    %45 = vector.load %arg2[%c8, %c0_20, %c0_21] : memref<26x8x256xf32, #tpu.memory_space<vmem>>, vector<1x8x256xf32>
    %46 = vector.shape_cast %45 : vector<1x8x256xf32> to vector<8x256xf32>
    %47 = arith.mulf %46, %44 : vector<8x256xf32>
    %48 = arith.subf %43, %47 : vector<8x256xf32>
    %c205_i32 = arith.constant 205 : i32
    %49 = tpu.dynamic_rotate %0 by %c205_i32 dim 1 : vector<8x256xf32>, i32 -> vector<8x256xf32>
    %c9 = arith.constant 9 : index
    %c0_22 = arith.constant 0 : index
    %c0_23 = arith.constant 0 : index
    %50 = vector.load %arg2[%c9, %c0_22, %c0_23] : memref<26x8x256xf32, #tpu.memory_space<vmem>>, vector<1x8x256xf32>
    %51 = vector.shape_cast %50 : vector<1x8x256xf32> to vector<8x256xf32>
    %52 = arith.mulf %51, %49 : vector<8x256xf32>
    %53 = arith.subf %48, %52 : vector<8x256xf32>
    %c240_i32 = arith.constant 240 : i32
    %54 = tpu.dynamic_rotate %0 by %c240_i32 dim 1 : vector<8x256xf32>, i32 -> vector<8x256xf32>
    %c10 = arith.constant 10 : index
    %c0_24 = arith.constant 0 : index
    %c0_25 = arith.constant 0 : index
    %55 = vector.load %arg2[%c10, %c0_24, %c0_25] : memref<26x8x256xf32, #tpu.memory_space<vmem>>, vector<1x8x256xf32>
    %56 = vector.shape_cast %55 : vector<1x8x256xf32> to vector<8x256xf32>
    %57 = arith.mulf %56, %54 : vector<8x256xf32>
    %58 = arith.subf %53, %57 : vector<8x256xf32>
    %c208_i32 = arith.constant 208 : i32
    %59 = tpu.dynamic_rotate %0 by %c208_i32 dim 1 : vector<8x256xf32>, i32 -> vector<8x256xf32>
    %c11 = arith.constant 11 : index
    %c0_26 = arith.constant 0 : index
    %c0_27 = arith.constant 0 : index
    %60 = vector.load %arg2[%c11, %c0_26, %c0_27] : memref<26x8x256xf32, #tpu.memory_space<vmem>>, vector<1x8x256xf32>
    %61 = vector.shape_cast %60 : vector<1x8x256xf32> to vector<8x256xf32>
    %62 = arith.mulf %61, %59 : vector<8x256xf32>
    %63 = arith.subf %58, %62 : vector<8x256xf32>
    %c241_i32 = arith.constant 241 : i32
    %64 = tpu.dynamic_rotate %0 by %c241_i32 dim 1 : vector<8x256xf32>, i32 -> vector<8x256xf32>
    %c12 = arith.constant 12 : index
    %c0_28 = arith.constant 0 : index
    %c0_29 = arith.constant 0 : index
    %65 = vector.load %arg2[%c12, %c0_28, %c0_29] : memref<26x8x256xf32, #tpu.memory_space<vmem>>, vector<1x8x256xf32>
    %66 = vector.shape_cast %65 : vector<1x8x256xf32> to vector<8x256xf32>
    %67 = arith.mulf %66, %64 : vector<8x256xf32>
    %68 = arith.subf %63, %67 : vector<8x256xf32>
    %c211_i32 = arith.constant 211 : i32
    %69 = tpu.dynamic_rotate %0 by %c211_i32 dim 1 : vector<8x256xf32>, i32 -> vector<8x256xf32>
    %c13 = arith.constant 13 : index
    %c0_30 = arith.constant 0 : index
    %c0_31 = arith.constant 0 : index
    %70 = vector.load %arg2[%c13, %c0_30, %c0_31] : memref<26x8x256xf32, #tpu.memory_space<vmem>>, vector<1x8x256xf32>
    %71 = vector.shape_cast %70 : vector<1x8x256xf32> to vector<8x256xf32>
    %72 = arith.mulf %71, %69 : vector<8x256xf32>
    %73 = arith.subf %68, %72 : vector<8x256xf32>
    %c255_i32 = arith.constant 255 : i32
    %74 = tpu.dynamic_rotate %0 by %c255_i32 dim 1 : vector<8x256xf32>, i32 -> vector<8x256xf32>
    %c14 = arith.constant 14 : index
    %c0_32 = arith.constant 0 : index
    %c0_33 = arith.constant 0 : index
    %75 = vector.load %arg2[%c14, %c0_32, %c0_33] : memref<26x8x256xf32, #tpu.memory_space<vmem>>, vector<1x8x256xf32>
    %76 = vector.shape_cast %75 : vector<1x8x256xf32> to vector<8x256xf32>
    %77 = arith.mulf %76, %74 : vector<8x256xf32>
    %78 = arith.subf %73, %77 : vector<8x256xf32>
    %c253_i32 = arith.constant 253 : i32
    %79 = tpu.dynamic_rotate %0 by %c253_i32 dim 1 : vector<8x256xf32>, i32 -> vector<8x256xf32>
    %c15 = arith.constant 15 : index
    %c0_34 = arith.constant 0 : index
    %c0_35 = arith.constant 0 : index
    %80 = vector.load %arg2[%c15, %c0_34, %c0_35] : memref<26x8x256xf32, #tpu.memory_space<vmem>>, vector<1x8x256xf32>
    %81 = vector.shape_cast %80 : vector<1x8x256xf32> to vector<8x256xf32>
    %82 = arith.mulf %81, %79 : vector<8x256xf32>
    %83 = arith.subf %78, %82 : vector<8x256xf32>
    %c17 = arith.constant 17 : index
    %c0_36 = arith.constant 0 : index
    %c0_37 = arith.constant 0 : index
    %84 = vector.load %arg2[%c17, %c0_36, %c0_37] : memref<26x8x256xf32, #tpu.memory_space<vmem>>, vector<1x8x256xf32>
    %85 = vector.shape_cast %84 : vector<1x8x256xf32> to vector<8x256xf32>
    %86 = arith.addf %83, %85 : vector<8x256xf32>
    %87 = arith.negf %86 : vector<8x256xf32>
    %88 = math.exp %87 : vector<8x256xf32>
    %cst = arith.constant 1.000000e+00 : f32
    %89 = vector.broadcast %cst : f32 to vector<8x256xf32>
    %90 = arith.addf %89, %88 : vector<8x256xf32>
    %91 = arith.divf %89, %90 : vector<8x256xf32>
    %92 = arith.mulf %86, %91 : vector<8x256xf32>
    %c18 = arith.constant 18 : index
    %c0_38 = arith.constant 0 : index
    %c0_39 = arith.constant 0 : index
    %93 = vector.load %arg2[%c18, %c0_38, %c0_39] : memref<26x8x256xf32, #tpu.memory_space<vmem>>, vector<1x8x256xf32>
    %94 = vector.shape_cast %93 : vector<1x8x256xf32> to vector<8x256xf32>
    %95 = arith.mulf %94, %92 : vector<8x256xf32>
    %c7_i32 = arith.constant 7 : i32
    %96 = tpu.dynamic_rotate %92 by %c7_i32 dim 0 : vector<8x256xf32>, i32 -> vector<8x256xf32>
    %c3_i32_40 = arith.constant 3 : i32
    %97 = tpu.dynamic_rotate %92 by %c3_i32_40 dim 0 : vector<8x256xf32>, i32 -> vector<8x256xf32>
    %c20 = arith.constant 20 : index
    %c0_41 = arith.constant 0 : index
    %c0_42 = arith.constant 0 : index
    %98 = vector.load %arg2[%c20, %c0_41, %c0_42] : memref<26x8x256xf32, #tpu.memory_space<vmem>>, vector<1x8x256xf32>
    %99 = vector.shape_cast %98 : vector<1x8x256xf32> to vector<8x256xf32>
    %100 = arith.mulf %99, %96 : vector<8x256xf32>
    %101 = arith.addf %95, %100 : vector<8x256xf32>
    %c21 = arith.constant 21 : index
    %c0_43 = arith.constant 0 : index
    %c0_44 = arith.constant 0 : index
    %102 = vector.load %arg2[%c21, %c0_43, %c0_44] : memref<26x8x256xf32, #tpu.memory_space<vmem>>, vector<1x8x256xf32>
    %103 = vector.shape_cast %102 : vector<1x8x256xf32> to vector<8x256xf32>
    %104 = arith.mulf %103, %97 : vector<8x256xf32>
    %105 = arith.addf %101, %104 : vector<8x256xf32>
    %c6_i32 = arith.constant 6 : i32
    %106 = tpu.dynamic_rotate %92 by %c6_i32 dim 0 : vector<8x256xf32>, i32 -> vector<8x256xf32>
    %c2_i32 = arith.constant 2 : i32
    %107 = tpu.dynamic_rotate %92 by %c2_i32 dim 0 : vector<8x256xf32>, i32 -> vector<8x256xf32>
    %c22 = arith.constant 22 : index
    %c0_45 = arith.constant 0 : index
    %c0_46 = arith.constant 0 : index
    %108 = vector.load %arg2[%c22, %c0_45, %c0_46] : memref<26x8x256xf32, #tpu.memory_space<vmem>>, vector<1x8x256xf32>
    %109 = vector.shape_cast %108 : vector<1x8x256xf32> to vector<8x256xf32>
    %110 = arith.mulf %109, %106 : vector<8x256xf32>
    %111 = arith.addf %105, %110 : vector<8x256xf32>
    %c23 = arith.constant 23 : index
    %c0_47 = arith.constant 0 : index
    %c0_48 = arith.constant 0 : index
    %112 = vector.load %arg2[%c23, %c0_47, %c0_48] : memref<26x8x256xf32, #tpu.memory_space<vmem>>, vector<1x8x256xf32>
    %113 = vector.shape_cast %112 : vector<1x8x256xf32> to vector<8x256xf32>
    %114 = arith.mulf %113, %107 : vector<8x256xf32>
    %115 = arith.addf %111, %114 : vector<8x256xf32>
    %c5_i32 = arith.constant 5 : i32
    %116 = tpu.dynamic_rotate %92 by %c5_i32 dim 0 : vector<8x256xf32>, i32 -> vector<8x256xf32>
    %c1_i32_49 = arith.constant 1 : i32
    %117 = tpu.dynamic_rotate %92 by %c1_i32_49 dim 0 : vector<8x256xf32>, i32 -> vector<8x256xf32>
    %c24 = arith.constant 24 : index
    %c0_50 = arith.constant 0 : index
    %c0_51 = arith.constant 0 : index
    %118 = vector.load %arg2[%c24, %c0_50, %c0_51] : memref<26x8x256xf32, #tpu.memory_space<vmem>>, vector<1x8x256xf32>
    %119 = vector.shape_cast %118 : vector<1x8x256xf32> to vector<8x256xf32>
    %120 = arith.mulf %119, %116 : vector<8x256xf32>
    %121 = arith.addf %115, %120 : vector<8x256xf32>
    %c25 = arith.constant 25 : index
    %c0_52 = arith.constant 0 : index
    %c0_53 = arith.constant 0 : index
    %122 = vector.load %arg2[%c25, %c0_52, %c0_53] : memref<26x8x256xf32, #tpu.memory_space<vmem>>, vector<1x8x256xf32>
    %123 = vector.shape_cast %122 : vector<1x8x256xf32> to vector<8x256xf32>
    %124 = arith.mulf %123, %117 : vector<8x256xf32>
    %125 = arith.addf %121, %124 : vector<8x256xf32>
    %126 = arith.negf %125 : vector<8x256xf32>
    %127 = math.exp %126 : vector<8x256xf32>
    %cst_54 = arith.constant 1.000000e+00 : f32
    %128 = vector.broadcast %cst_54 : f32 to vector<8x256xf32>
    %129 = arith.addf %128, %127 : vector<8x256xf32>
    %130 = arith.divf %128, %129 : vector<8x256xf32>
    %131 = arith.mulf %0, %130 : vector<8x256xf32>
    %132 = arith.addf %131, %0 : vector<8x256xf32>
    %c0_55 = arith.constant 0 : index
    %c0_56 = arith.constant 0 : index
    %133 = vector.load %arg3[%c0_55, %c0_56] : memref<8x256xf32, #tpu.memory_space<vmem>>, vector<8x256xf32>
    tpu.vector_store %arg3[%c0_55, %c0_56], %132 {strides = array<i32>} : memref<8x256xf32, #tpu.memory_space<vmem>>, vector<8x256xf32>,
    return
  }
  func.func @transform_0(%arg0: i32) -> (i32, i32) {
    %c0_i32 = arith.constant 0 : i32
    %c0_i32_0 = arith.constant 0 : i32
    return %arg0, %c0_i32 : i32, i32
  }
  func.func @transform_1(%arg0: i32) -> (i32, i32, i32) {
    %c0_i32 = arith.constant 0 : i32
    %c0_i32_0 = arith.constant 0 : i32
    %c0_i32_1 = arith.constant 0 : i32
    %c0_i32_2 = arith.constant 0 : i32
    return %c0_i32, %c0_i32_0, %c0_i32_1 : i32, i32, i32
  }
  func.func @transform_2(%arg0: i32) -> (i32, i32) {
    %c0_i32 = arith.constant 0 : i32
    %c0_i32_0 = arith.constant 0 : i32
    return %arg0, %c0_i32 : i32, i32
  }
}

</mosaic_0001>

<llo_original>
// kernel: tpu_custom_call.1
$region0: #{tpu_custom_call.1}
  #allocation0 [shape = 'u32[]', space=smem, size = 0x4, offset = 0x4, fixed_abs, tag = 'smem constant byte address 0x4 - core index']
  #allocation1 [shape = 'u32[72,128]{1,0:T(1,128)}', space=vmem, size = 0x9000, scoped, tag = 'internal scratch']
  %s0 = inlined_call_operand.hbm [shape: f32[8,256], index: 0, kind: input, shape index: {}]
  %s1 = inlined_call_operand.hbm [shape: f32[26,8,256], index: 1, kind: input, shape index: {}]
  %s2 = inlined_call_operand.hbm [shape: f32[8,256], index: 2, kind: output, shape index: {}]
  %s3 = sld [smem:[#allocation0]]
  $region26: #{tpu_custom_call.1} parent=0
    _
  %s5 = ssub.s32 1, %s3
  %s6 = scalar_select 0, %s5, %s3
  $region1: #{tpu_custom_call.1} parent=0
    #allocation2 [shape = 'u8[8192]{0}', space=vmem, size = 0x2000, scoped, tag = 'input window, operand 0, single buffered']
    #allocation3 [shape = 's32[1]{0}', space=sflag, size = 0x4, scoped, tag = 'scoped memory for tpu_custom_call.1']
    #allocation4 [shape = 's32[1]{0}', space=sflag, size = 0x4, scoped, tag = 'scoped memory for tpu_custom_call.1']
    #allocation5 [shape = 'u8[212992]{0}', space=vmem, size = 0x34000, scoped, tag = 'input window, operand 1, single buffered']
    #allocation6 [shape = 's32[1]{0}', space=sflag, size = 0x4, scoped, tag = 'scoped memory for tpu_custom_call.1']
    #allocation7 [shape = 'u8[8192]{0}', space=vmem, size = 0x2000, scoped, tag = 'output window, operand 0, single buffered']
    %7 = vsyncpa [#allocation3], 0
    %8 = vsyncpa [#allocation6], 0
    %9 = vsyncpa [#allocation4], 0
    // Predicated region
    $region2: #{tpu_custom_call.1} parent=1 // pred_check
      _
    $region3: #{tpu_custom_call.1} parent=1 // pred_check_branch
      %11 = sbr.rel (0) target = $region5
    $region4: #{tpu_custom_call.1} parent=1 // pred_region
      %13 = vsyncadd [#allocation3], 0
      %s15 = sshll.u32 %s0, 4
      %s16 = int_to_ptr.hbm [resolvable:$true] %s15
      %s17 = sshll.u32 [#allocation2], 4
      %s18 = int_to_ptr.vmem [resolvable:$true] %s17
      %20 = dma.hbm_to_vmem [thread:$0]  %s16, 256, %s18, [#allocation3]
    $region5: #{tpu_custom_call.1} parent=1 // pred_fallthru
      _
    // Predicated region
    $region6: #{tpu_custom_call.1} parent=1 // pred_check
      _
    $region7: #{tpu_custom_call.1} parent=1 // pred_check_branch
      %22 = sbr.rel (0) target = $region9
    $region8: #{tpu_custom_call.1} parent=1 // pred_region
      %24 = vsyncadd [#allocation6], 0
      %s25 = sshll.u32 %s1, 4
      %s26 = int_to_ptr.hbm [resolvable:$true] %s25
      %s27 = sshll.u32 [#allocation5], 4
      %s28 = int_to_ptr.vmem [resolvable:$true] %s27
      %33 = dma.hbm_to_vmem [thread:$0]  %s26, 6656, %s28, [#allocation6], 256, 256, 16
    $region9: #{tpu_custom_call.1} parent=1 // pred_fallthru
      _
    // Predicated region
    $region10: #{tpu_custom_call.1} parent=1 // pred_check
      _
    $region11: #{tpu_custom_call.1} parent=1 // pred_check_branch
      %35 = sbr.rel (0) target = $region13
    $region12: #{tpu_custom_call.1} parent=1 // pred_region
      %37 = dma.done [#allocation3], 256
    $region13: #{tpu_custom_call.1} parent=1 // pred_fallthru
      _
    // Predicated region
    $region14: #{tpu_custom_call.1} parent=1 // pred_check
      _
    $region15: #{tpu_custom_call.1} parent=1 // pred_check_branch
      %39 = sbr.rel (0) target = $region17
    $region16: #{tpu_custom_call.1} parent=1 // pred_region
      %41 = dma.done [#allocation6], 6656
    $region17: #{tpu_custom_call.1} parent=1 // pred_fallthru
      _
    %v42 = vld [vmem:[#allocation2] sm:$0xff]
    %v43 = vld [vmem:[#allocation2 + $0x8] sm:$0xff]
    %s44 = scalar_lea.vmem [#allocation5], 256
    %v45 = vld [vmem:[%s44] sm:$0xff]
    %v46 = vld [vmem:[%s44 + $0x8] sm:$0xff]
    %v47 = vmul.f32 %v45, %v42
    %v48 = vmul.f32 %v46, %v43
    %49 = vrot.lane.b32.xlu0 %v42, 17
    %v50 = vpop.permute.xlu0 %49
    %51 = vrot.lane.b32.xlu0 %v43, 17
    %v52 = vpop.permute.xlu0 %51
    %v53 = vlaneseq
    %v54 = vand.u32 %v53, 127
    %vm55 = vcmp.lt.s32.totalorder %v54, 17
    %v56 = vsel %vm55, %v50, %v52
    %v57 = vsel %vm55, %v52, %v50
    %v58 = vld [vmem:[#allocation5] sm:$0xff]
    %v59 = vld [vmem:[#allocation5 + $0x8] sm:$0xff]
    %v60 = vmul.f32 %v58, %v57
    %v61 = vmul.f32 %v59, %v56
    %v62 = vsub.f32 %v47, %v60
    %v63 = vsub.f32 %v48, %v61
    %64 = vrot.lane.b32.xlu0 %v42, 51
    %v65 = vpop.permute.xlu0 %64
    %66 = vrot.lane.b32.xlu0 %v43, 51
    %v67 = vpop.permute.xlu0 %66
    %vm68 = vcmp.lt.s32.totalorder %v54, 51
    %v69 = vsel %vm68, %v65, %v67
    %v70 = vsel %vm68, %v67, %v65
    %s71 = scalar_lea.vmem [#allocation5], 16
    %v72 = vld [vmem:[%s71] sm:$0xff]
    %v73 = vld [vmem:[%s71 + $0x8] sm:$0xff]
    %v74 = vmul.f32 %v72, %v70
    %v75 = vmul.f32 %v73, %v69
    %v76 = vsub.f32 %v62, %v74
    %v77 = vsub.f32 %v63, %v75
    %78 = vrot.lane.b32.xlu0 %v42, 16
    %v79 = vpop.permute.xlu0 %78
    %80 = vrot.lane.b32.xlu0 %v43, 16
    %v81 = vpop.permute.xlu0 %80
    %vm82 = vcmp.lt.s32.totalorder %v54, 16
    %v83 = vsel %vm82, %v79, %v81
    %v84 = vsel %vm82, %v81, %v79
    %s85 = scalar_lea.vmem [#allocation5], 32
    %v86 = vld [vmem:[%s85] sm:$0xff]
    %v87 = vld [vmem:[%s85 + $0x8] sm:$0xff]
    %v88 = vmul.f32 %v86, %v84
    %v89 = vmul.f32 %v87, %v83
    %v90 = vsub.f32 %v76, %v88
    %v91 = vsub.f32 %v77, %v89
    %92 = vrot.lane.b32.xlu0 %v42, 48
    %v93 = vpop.permute.xlu0 %92
    %94 = vrot.lane.b32.xlu0 %v43, 48
    %v95 = vpop.permute.xlu0 %94
    %vm96 = vcmp.lt.s32.totalorder %v54, 48
    %v97 = vsel %vm96, %v93, %v95
    %v98 = vsel %vm96, %v95, %v93
    %s99 = scalar_lea.vmem [#allocation5], 48
    %v100 = vld [vmem:[%s99] sm:$0xff]
    %v101 = vld [vmem:[%s99 + $0x8] sm:$0xff]
    %v102 = vmul.f32 %v100, %v98
    %v103 = vmul.f32 %v101, %v97
    %v104 = vsub.f32 %v90, %v102
    %v105 = vsub.f32 %v91, %v103
    %106 = vrot.lane.b32.xlu0 %v42, 15
    %v107 = vpop.permute.xlu0 %106
    %108 = vrot.lane.b32.xlu0 %v43, 15
    %v109 = vpop.permute.xlu0 %108
    %vm110 = vcmp.lt.s32.totalorder %v54, 15
    %v111 = vsel %vm110, %v107, %v109
    %v112 = vsel %vm110, %v109, %v107
    %s113 = scalar_lea.vmem [#allocation5], 64
    %v114 = vld [vmem:[%s113] sm:$0xff]
    %v115 = vld [vmem:[%s113 + $0x8] sm:$0xff]
    %v116 = vmul.f32 %v114, %v112
    %v117 = vmul.f32 %v115, %v111
    %v118 = vsub.f32 %v104, %v116
    %v119 = vsub.f32 %v105, %v117
    %120 = vrot.lane.b32.xlu0 %v42, 45
    %v121 = vpop.permute.xlu0 %120
    %122 = vrot.lane.b32.xlu0 %v43, 45
    %v123 = vpop.permute.xlu0 %122
    %vm124 = vcmp.lt.s32.totalorder %v54, 45
    %v125 = vsel %vm124, %v121, %v123
    %v126 = vsel %vm124, %v123, %v121
    %s127 = scalar_lea.vmem [#allocation5], 80
    %v128 = vld [vmem:[%s127] sm:$0xff]
    %v129 = vld [vmem:[%s127 + $0x8] sm:$0xff]
    %v130 = vmul.f32 %v128, %v126
    %v131 = vmul.f32 %v129, %v125
    %v132 = vsub.f32 %v118, %v130
    %v133 = vsub.f32 %v119, %v131
    %134 = vrot.lane.b32.xlu0 %v42, 1
    %v135 = vpop.permute.xlu0 %134
    %136 = vrot.lane.b32.xlu0 %v43, 1
    %v137 = vpop.permute.xlu0 %136
    %vm138 = vcmp.lt.s32.totalorder %v54, 1
    %v139 = vsel %vm138, %v135, %v137
    %v140 = vsel %vm138, %v137, %v135
    %s141 = scalar_lea.vmem [#allocation5], 96
    %v142 = vld [vmem:[%s141] sm:$0xff]
    %v143 = vld [vmem:[%s141 + $0x8] sm:$0xff]
    %v144 = vmul.f32 %v142, %v140
    %v145 = vmul.f32 %v143, %v139
    %v146 = vsub.f32 %v132, %v144
    %v147 = vsub.f32 %v133, %v145
    %148 = vrot.lane.b32.xlu0 %v42, 3
    %v149 = vpop.permute.xlu0 %148
    %150 = vrot.lane.b32.xlu0 %v43, 3
    %v151 = vpop.permute.xlu0 %150
    %vm152 = vcmp.lt.s32.totalorder %v54, 3
    %v153 = vsel %vm152, %v149, %v151
    %v154 = vsel %vm152, %v151, %v149
    %s155 = scalar_lea.vmem [#allocation5], 112
    %v156 = vld [vmem:[%s155] sm:$0xff]
    %v157 = vld [vmem:[%s155 + $0x8] sm:$0xff]
    %v158 = vmul.f32 %v156, %v154
    %v159 = vmul.f32 %v157, %v153
    %v160 = vsub.f32 %v146, %v158
    %v161 = vsub.f32 %v147, %v159
    %162 = vrot.lane.b32.xlu0 %v42, 111
    %v163 = vpop.permute.xlu0 %162
    %164 = vrot.lane.b32.xlu0 %v43, 111
    %v165 = vpop.permute.xlu0 %164
    %vm166 = vcmp.lt.s32.totalorder %v54, 111
    %v167 = vsel %vm166, %v163, %v165
    %v168 = vsel %vm166, %v165, %v163
    %s169 = scalar_lea.vmem [#allocation5], 128
    %v170 = vld [vmem:[%s169] sm:$0xff]
    %v171 = vld [vmem:[%s169 + $0x8] sm:$0xff]
    %v172 = vmul.f32 %v170, %v167
    %v173 = vmul.f32 %v171, %v168
    %v174 = vsub.f32 %v160, %v172
    %v175 = vsub.f32 %v161, %v173
    %176 = vrot.lane.b32.xlu0 %v42, 77
    %v177 = vpop.permute.xlu0 %176
    %178 = vrot.lane.b32.xlu0 %v43, 77
    %v179 = vpop.permute.xlu0 %178
    %vm180 = vcmp.lt.s32.totalorder %v54, 77
    %v181 = vsel %vm180, %v177, %v179
    %v182 = vsel %vm180, %v179, %v177
    %s183 = scalar_lea.vmem [#allocation5], 144
    %v184 = vld [vmem:[%s183] sm:$0xff]
    %v185 = vld [vmem:[%s183 + $0x8] sm:$0xff]
    %v186 = vmul.f32 %v184, %v181
    %v187 = vmul.f32 %v185, %v182
    %v188 = vsub.f32 %v174, %v186
    %v189 = vsub.f32 %v175, %v187
    %190 = vrot.lane.b32.xlu0 %v42, 112
    %v191 = vpop.permute.xlu0 %190
    %192 = vrot.lane.b32.xlu0 %v43, 112
    %v193 = vpop.permute.xlu0 %192
    %vm194 = vcmp.lt.s32.totalorder %v54, 112
    %v195 = vsel %vm194, %v191, %v193
    %v196 = vsel %vm194, %v193, %v191
    %s197 = scalar_lea.vmem [#allocation5], 160
    %v198 = vld [vmem:[%s197] sm:$0xff]
    %v199 = vld [vmem:[%s197 + $0x8] sm:$0xff]
    %v200 = vmul.f32 %v198, %v195
    %v201 = vmul.f32 %v199, %v196
    %v202 = vsub.f32 %v188, %v200
    %v203 = vsub.f32 %v189, %v201
    %204 = vrot.lane.b32.xlu0 %v42, 80
    %v205 = vpop.permute.xlu0 %204
    %206 = vrot.lane.b32.xlu0 %v43, 80
    %v207 = vpop.permute.xlu0 %206
    %vm208 = vcmp.lt.s32.totalorder %v54, 80
    %v209 = vsel %vm208, %v205, %v207
    %v210 = vsel %vm208, %v207, %v205
    %s211 = scalar_lea.vmem [#allocation5], 176
    %v212 = vld [vmem:[%s211] sm:$0xff]
    %v213 = vld [vmem:[%s211 + $0x8] sm:$0xff]
    %v214 = vmul.f32 %v212, %v209
    %v215 = vmul.f32 %v213, %v210
    %v216 = vsub.f32 %v202, %v214
    %v217 = vsub.f32 %v203, %v215
    %218 = vrot.lane.b32.xlu0 %v42, 113
    %v219 = vpop.permute.xlu0 %218
    %220 = vrot.lane.b32.xlu0 %v43, 113
    %v221 = vpop.permute.xlu0 %220
    %vm222 = vcmp.lt.s32.totalorder %v54, 113
    %v223 = vsel %vm222, %v219, %v221
    %v224 = vsel %vm222, %v221, %v219
    %s225 = scalar_lea.vmem [#allocation5], 192
    %v226 = vld [vmem:[%s225] sm:$0xff]
    %v227 = vld [vmem:[%s225 + $0x8] sm:$0xff]
    %v228 = vmul.f32 %v226, %v223
    %v229 = vmul.f32 %v227, %v224
    %v230 = vsub.f32 %v216, %v228
    %v231 = vsub.f32 %v217, %v229
    %232 = vrot.lane.b32.xlu0 %v42, 83
    %v233 = vpop.permute.xlu0 %232
    %234 = vrot.lane.b32.xlu0 %v43, 83
    %v235 = vpop.permute.xlu0 %234
    %vm236 = vcmp.lt.s32.totalorder %v54, 83
    %v237 = vsel %vm236, %v233, %v235
    %v238 = vsel %vm236, %v235, %v233
    %s239 = scalar_lea.vmem [#allocation5], 208
    %v240 = vld [vmem:[%s239] sm:$0xff]
    %v241 = vld [vmem:[%s239 + $0x8] sm:$0xff]
    %v242 = vmul.f32 %v240, %v237
    %v243 = vmul.f32 %v241, %v238
    %v244 = vsub.f32 %v230, %v242
    %v245 = vsub.f32 %v231, %v243
    %246 = vrot.lane.b32.xlu0 %v42, 127
    %v247 = vpop.permute.xlu0 %246
    %248 = vrot.lane.b32.xlu0 %v43, 127
    %v249 = vpop.permute.xlu0 %248
    %vm250 = vcmp.lt.s32.totalorder %v54, 127
    %v251 = vsel %vm250, %v247, %v249
    %v252 = vsel %vm250, %v249, %v247
    %s253 = scalar_lea.vmem [#allocation5], 224
    %v254 = vld [vmem:[%s253] sm:$0xff]
    %v255 = vld [vmem:[%s253 + $0x8] sm:$0xff]
    %v256 = vmul.f32 %v254, %v251
    %v257 = vmul.f32 %v255, %v252
    %v258 = vsub.f32 %v244, %v256
    %v259 = vsub.f32 %v245, %v257
    %260 = vrot.lane.b32.xlu0 %v42, 125
    %v261 = vpop.permute.xlu0 %260
    %262 = vrot.lane.b32.xlu0 %v43, 125
    %v263 = vpop.permute.xlu0 %262
    %vm264 = vcmp.lt.s32.totalorder %v54, 125
    %v265 = vsel %vm264, %v261, %v263
    %v266 = vsel %vm264, %v263, %v261
    %s267 = scalar_lea.vmem [#allocation5], 240
    %v268 = vld [vmem:[%s267] sm:$0xff]
    %v269 = vld [vmem:[%s267 + $0x8] sm:$0xff]
    %v270 = vmul.f32 %v268, %v265
    %v271 = vmul.f32 %v269, %v266
    %v272 = vsub.f32 %v258, %v270
    %v273 = vsub.f32 %v259, %v271
    %s274 = scalar_lea.vmem [#allocation5], 272
    %v275 = vld [vmem:[%s274] sm:$0xff]
    %v276 = vld [vmem:[%s274 + $0x8] sm:$0xff]
    %v277 = vadd.f32 %v272, %v275
    %v278 = vadd.f32 %v273, %v276
    %v279 = vxor.u32 %v277, 2147483648
    %v280 = vxor.u32 %v278, 2147483648
    %v281 = vmul.f32 %v279, 1.442695
    %v282 = vpow.pop %v281
    %v283 = vmul.f32 %v280, 1.442695
    %v284 = vpow.pop %v283
    %v285 = vadd.f32 %v282, 1.0
    %v286 = vadd.f32 %v284, 1.0
    %v287 = vrcp.pop %v285
    %v288 = vmul.f32 %v285, %v287
    %v289 = vsub.f32 1.0, %v288
    %v290 = vmul.f32 %v287, %v289
    %v291 = vadd.f32 %v287, %v290
    %vm292 = vweird.f32 %v285
    %vm293 = vweird.f32 %v287
    %vm294 = vmor %vm292, %vm293
    %v295 = vsel %vm294, %v287, %v291
    %v296 = vand.u32 2147483647, %v285
    %vm297 = vcmp.eq.f32.partialorder %v296, 8.507059e+37
    %v298 = vand.u32 %v285, 2147483648
    %v299 = vor.u32 1.1754944e-38, %v298
    %v300 = vsel %vm297, %v299, %v295
    %v301 = vmul.f32 1.0, %v300
    %v302 = vrcp.pop %v286
    %v303 = vmul.f32 %v286, %v302
    %v304 = vsub.f32 1.0, %v303
    %v305 = vmul.f32 %v302, %v304
    %v306 = vadd.f32 %v302, %v305
    %vm307 = vweird.f32 %v286
    %vm308 = vweird.f32 %v302
    %vm309 = vmor %vm307, %vm308
    %v310 = vsel %vm309, %v302, %v306
    %v311 = vand.u32 2147483647, %v286
    %vm312 = vcmp.eq.f32.partialorder %v311, 8.507059e+37
    %v313 = vand.u32 %v286, 2147483648
    %v314 = vor.u32 1.1754944e-38, %v313
    %v315 = vsel %vm312, %v314, %v310
    %v316 = vmul.f32 1.0, %v315
    %v317 = vmul.f32 %v277, %v301
    %v318 = vmul.f32 %v278, %v316
    %s319 = scalar_lea.vmem [#allocation5], 288
    %v320 = vld [vmem:[%s319] sm:$0xff]
    %v321 = vld [vmem:[%s319 + $0x8] sm:$0xff]
    %v322 = vmul.f32 %v320, %v317
    %v323 = vmul.f32 %v321, %v318
    %v324 = vrot.slane %v317, 1
    %v325 = vrot.slane %v318, 1
    %v326 = vrot.slane %v317, 5
    %v327 = vrot.slane %v318, 5
    %s328 = scalar_lea.vmem [#allocation5], 320
    %v329 = vld [vmem:[%s328] sm:$0xff]
    %v330 = vld [vmem:[%s328 + $0x8] sm:$0xff]
    %v331 = vmul.f32 %v329, %v324
    %v332 = vmul.f32 %v330, %v325
    %v333 = vadd.f32 %v322, %v331
    %v334 = vadd.f32 %v323, %v332
    %s335 = scalar_lea.vmem [#allocation5], 336
    %v336 = vld [vmem:[%s335] sm:$0xff]
    %v337 = vld [vmem:[%s335 + $0x8] sm:$0xff]
    %v338 = vmul.f32 %v336, %v326
    %v339 = vmul.f32 %v337, %v327
    %v340 = vadd.f32 %v333, %v338
    %v341 = vadd.f32 %v334, %v339
    %v342 = vrot.slane %v317, 2
    %v343 = vrot.slane %v318, 2
    %v344 = vrot.slane %v317, 6
    %v345 = vrot.slane %v318, 6
    %s346 = scalar_lea.vmem [#allocation5], 352
    %v347 = vld [vmem:[%s346] sm:$0xff]
    %v348 = vld [vmem:[%s346 + $0x8] sm:$0xff]
    %v349 = vmul.f32 %v347, %v342
    %v350 = vmul.f32 %v348, %v343
    %v351 = vadd.f32 %v340, %v349
    %v352 = vadd.f32 %v341, %v350
    %s353 = scalar_lea.vmem [#allocation5], 368
    %v354 = vld [vmem:[%s353] sm:$0xff]
    %v355 = vld [vmem:[%s353 + $0x8] sm:$0xff]
    %v356 = vmul.f32 %v354, %v344
    %v357 = vmul.f32 %v355, %v345
    %v358 = vadd.f32 %v351, %v356
    %v359 = vadd.f32 %v352, %v357
    %v360 = vrot.slane %v317, 3
    %v361 = vrot.slane %v318, 3
    %v362 = vrot.slane %v317, 7
    %v363 = vrot.slane %v318, 7
    %s364 = scalar_lea.vmem [#allocation5], 384
    %v365 = vld [vmem:[%s364] sm:$0xff]
    %v366 = vld [vmem:[%s364 + $0x8] sm:$0xff]
    %v367 = vmul.f32 %v365, %v360
    %v368 = vmul.f32 %v366, %v361
    %v369 = vadd.f32 %v358, %v367
    %v370 = vadd.f32 %v359, %v368
    %s371 = scalar_lea.vmem [#allocation5], 400
    %v372 = vld [vmem:[%s371] sm:$0xff]
    %v373 = vld [vmem:[%s371 + $0x8] sm:$0xff]
    %v374 = vmul.f32 %v372, %v362
    %v375 = vmul.f32 %v373, %v363
    %v376 = vadd.f32 %v369, %v374
    %v377 = vadd.f32 %v370, %v375
    %v378 = vxor.u32 %v376, 2147483648
    %v379 = vxor.u32 %v377, 2147483648
    %v380 = vmul.f32 %v378, 1.442695
    %v381 = vpow.pop %v380
    %v382 = vmul.f32 %v379, 1.442695
    %v383 = vpow.pop %v382
    %v384 = vadd.f32 %v381, 1.0
    %v385 = vadd.f32 %v383, 1.0
    %v386 = vrcp.pop %v384
    %v387 = vmul.f32 %v384, %v386
    %v388 = vsub.f32 1.0, %v387
    %v389 = vmul.f32 %v386, %v388
    %v390 = vadd.f32 %v386, %v389
    %vm391 = vweird.f32 %v384
    %vm392 = vweird.f32 %v386
    %vm393 = vmor %vm391, %vm392
    %v394 = vsel %vm393, %v386, %v390
    %v395 = vand.u32 2147483647, %v384
    %vm396 = vcmp.eq.f32.partialorder %v395, 8.507059e+37
    %v397 = vand.u32 %v384, 2147483648
    %v398 = vor.u32 1.1754944e-38, %v397
    %v399 = vsel %vm396, %v398, %v394
    %v400 = vmul.f32 1.0, %v399
    %v401 = vrcp.pop %v385
    %v402 = vmul.f32 %v385, %v401
    %v403 = vsub.f32 1.0, %v402
    %v404 = vmul.f32 %v401, %v403
    %v405 = vadd.f32 %v401, %v404
    %vm406 = vweird.f32 %v385
    %vm407 = vweird.f32 %v401
    %vm408 = vmor %vm406, %vm407
    %v409 = vsel %vm408, %v401, %v405
    %v410 = vand.u32 2147483647, %v385
    %vm411 = vcmp.eq.f32.partialorder %v410, 8.507059e+37
    %v412 = vand.u32 %v385, 2147483648
    %v413 = vor.u32 1.1754944e-38, %v412
    %v414 = vsel %vm411, %v413, %v409
    %v415 = vmul.f32 1.0, %v414
    %v416 = vmul.f32 %v42, %v400
    %v417 = vmul.f32 %v43, %v415
    %v418 = vadd.f32 %v416, %v42
    %v419 = vadd.f32 %v417, %v43
    %420 = vst [vmem:[#allocation7] sm:$0xff] %v418
    %421 = vst [vmem:[#allocation7 + $0x8] sm:$0xff] %v419
    // Predicated region
    $region18: #{tpu_custom_call.1} parent=1 // pred_check
      _
    $region19: #{tpu_custom_call.1} parent=1 // pred_check_branch
      %423 = sbr.rel (0) target = $region21
    $region20: #{tpu_custom_call.1} parent=1 // pred_region
      %425 = vsyncadd [#allocation4], 0
      %s427 = sshll.u32 [#allocation7], 4
      %s428 = int_to_ptr.vmem [resolvable:$true] %s427
      %s429 = sshll.u32 %s2, 4
      %s430 = int_to_ptr.hbm [resolvable:$true] %s429
      %432 = dma.vmem_to_hbm [thread:$0]  %s428, 256, %s430, [#allocation4]
    $region21: #{tpu_custom_call.1} parent=1 // pred_fallthru
      _
    // Predicated region
    $region22: #{tpu_custom_call.1} parent=1 // pred_check
      _
    $region23: #{tpu_custom_call.1} parent=1 // pred_check_branch
      %434 = sbr.rel (0) target = $region25
    $region24: #{tpu_custom_call.1} parent=1 // pred_region
      %436 = dma.done [#allocation4], 256
    $region25: #{tpu_custom_call.1} parent=1 // pred_fallthru
      _
    %437 = vsyncpa [#allocation3], 1
    %438 = vsyncpa [#allocation6], 1
    %439 = vsyncpa [#allocation4], 1

</llo_original>
